<compile_context>
chip_gen: v7x
topology: tpu7x:2x2x1
jax: 0.10.0
libtpu: 0.0.40
codegen_flags: <defaults>
</compile_context>

<pallas_src>
import functools

import jax
import jax.numpy as jnp
from jax.experimental import pallas as pl
from jax.experimental.pallas import tpu as pltpu


def _causal_shift(v, off):
    """Shift v (C, L) right along the time (lane) axis by `off`, zero-fill left."""
    if off == 0:
        return v
    c, l = v.shape
    if off >= l:
        return jnp.zeros_like(v)
    # Pure lane-axis shift/blend (XLU-class work); no sublane slicing, no scratch.
    return jnp.concatenate(
        [jnp.zeros((c, off), v.dtype), v[:, :l - off]], axis=1)


def _temporal_block_kernel(x_ref, w1_ref, b1_ref, w2_ref, b2_ref,
                           wd_ref, bd_ref, o_ref, *, dilation, has_downsample):
    """One batch-block per grid step (a single step at these sizes).

    x_ref : (Bn, C_in, L)     bf16 input (PyTorch (N, C, L) layout, unpadded)
    w1_ref: (K, C_out, C_in)  bf16; tap k multiplies x[:, l - k*dilation]
    w2_ref: (K, C_out, C_out) bf16
    b*_ref: (C_out, 1)        f32 biases
    wd_ref: (C_out, C_in)     bf16 1x1 downsample weight (residual path)
    o_ref : (Bn, C_out, L)    f32 output
    """
    bn = x_ref.shape[0]
    ksize = w1_ref.shape[0]

    def causal_conv(v, w_ref, b_ref):
        # v: (C, L) bf16 -> pre-activation (C_out, L) f32.
        # Bias is folded into the accumulator once (no extra (C_out, L) temp);
        # each tap's f32 partial product is causally shifted along lanes, so the
        # "virtual left zero-pad" never materializes.
        acc = b_ref[...] + jnp.dot(w_ref[0], v,
                                   preferred_element_type=jnp.float32)
        for k in range(1, ksize):
            pk = jnp.dot(w_ref[k], v, preferred_element_type=jnp.float32)
            acc = acc + _causal_shift(pk, k * dilation)
        return acc

    for b in range(bn):                         # Bn is small & static: unrolled
        xb = x_ref[b]                                           # (C_in, L) bf16
        h = jnp.maximum(causal_conv(xb, w1_ref, b1_ref), 0.0)   # f32 epilogue
        # TODO(synk): nn.Dropout is stochastic only in train mode; identity here.
        h = h.astype(jnp.bfloat16)              # bf16 MXU operands, f32 accum
        out = jnp.maximum(causal_conv(h, w2_ref, b2_ref), 0.0)
        if has_downsample:
            res = jnp.dot(wd_ref[...], xb,
                          preferred_element_type=jnp.float32) + bd_ref[...]
        else:
            res = xb.astype(jnp.float32)
        # NOTE: the residual cannot be fused into the conv2 accumulator because
        # the module applies ReLU to the conv2 output *before* adding `res`.
        o_ref[b] = jnp.maximum(out + res, 0.0).astype(o_ref.dtype)


def temporal_block_forward(x_ncl, w1, b1, w2, b2, wd, bd, *,
                           kernel_size, stride, dilation, padding,
                           has_downsample, batch_block=None):
    """x_ncl: (N, C_in, L) (PyTorch layout). Returns (N, C_out, L) float32."""
    assert stride == 1, "TCN TemporalBlock uses stride=1"
    assert padding == (kernel_size - 1) * dilation, "causal padding expected"
    N, C_in, L = x_ncl.shape
    K, C_out, _ = w1.shape
    assert K == kernel_size

    # Whole batch in one grid step: per-step overhead dominates at these shapes.
    # For larger N pass batch_block to tile the batch (keep the parallel grid
    # even so both v7x TensorCores are used).
    bn = N if batch_block is None else batch_block
    assert N % bn == 0
    # TODO(synk): for production L (thousands), add an L-tile grid axis with a
    # `padding`-deep halo and size tiles against v7x's 64 MiB VMEM.

    x_bf = x_ncl.astype(jnp.bfloat16)   # halve HBM->VMEM bytes; accumulate f32

    kernel = functools.partial(_temporal_block_kernel, dilation=dilation,
                               has_downsample=has_downsample)

    # Explicit VMEM budget: double-buffered x/out blocks + resident weights,
    # padded to hardware tiles, with generous headroom (clamped to safe range).
    def tile_bytes(shape, itemsize, sub=8):
        lead = 1
        for d in shape[:-2]:
            lead *= d
        r = -(-shape[-2] // sub) * sub
        c = -(-shape[-1] // 128) * 128
        return lead * r * c * itemsize

    vmem = 2 * (tile_bytes((bn, C_in, L), 2, 16) + tile_bytes((bn, C_out, L), 4))
    vmem += (tile_bytes(w1.shape, 2, 16) + tile_bytes(w2.shape, 2, 16)
             + tile_bytes(wd.shape, 2, 16) + 3 * tile_bytes(b1.shape, 4))
    vmem_limit = int(min(32 * 1024 * 1024, max(8 * 1024 * 1024, 4 * vmem)))

    return pl.pallas_call(
        kernel,
        out_shape=jax.ShapeDtypeStruct((N, C_out, L), jnp.float32),
        grid=(N // bn,),
        in_specs=[
            pl.BlockSpec((bn, C_in, L), lambda i: (i, 0, 0)),
            pl.BlockSpec((K, C_out, C_in), lambda i: (0, 0, 0)),
            pl.BlockSpec((C_out, 1), lambda i: (0, 0)),
            pl.BlockSpec((K, C_out, C_out), lambda i: (0, 0, 0)),
            pl.BlockSpec((C_out, 1), lambda i: (0, 0)),
            pl.BlockSpec((C_out, C_in), lambda i: (0, 0)),
            pl.BlockSpec((C_out, 1), lambda i: (0, 0)),
        ],
        out_specs=pl.BlockSpec((bn, C_out, L), lambda i: (i, 0, 0)),
        compiler_params=pltpu.CompilerParams(
            dimension_semantics=("parallel",),
            vmem_limit_bytes=vmem_limit),
    )(x_bf, w1, b1, w2, b2, wd, bd)


# ---------------------------------------------------------------------------
# Parameter construction (deterministic, mirrors the PyTorch module's shapes)
# ---------------------------------------------------------------------------
def _weight_norm(v, g):
    # w = g * v / ||v||, norm over all dims except dim 0 (PyTorch default).
    norm = jnp.sqrt(jnp.sum(v * v, axis=(1, 2, 3), keepdims=True))
    return g * v / norm


def make_params(key, n_inputs, n_outputs, kernel_size):
    ks = jax.random.split(key, 8)
    v1 = jax.random.normal(ks[0], (n_outputs, n_inputs, 1, kernel_size), jnp.float32) * 0.2
    g1 = 1.0 + 0.1 * jax.random.normal(ks[1], (n_outputs, 1, 1, 1), jnp.float32)
    b1 = 0.1 * jax.random.normal(ks[2], (n_outputs,), jnp.float32)
    v2 = jax.random.normal(ks[3], (n_outputs, n_outputs, 1, kernel_size), jnp.float32) * 0.2
    g2 = 1.0 + 0.1 * jax.random.normal(ks[4], (n_outputs, 1, 1, 1), jnp.float32)
    b2 = 0.1 * jax.random.normal(ks[5], (n_outputs,), jnp.float32)
    wd_v = jax.random.normal(ks[6], (n_outputs, n_inputs, 1), jnp.float32) * 0.2
    bd = 0.1 * jax.random.normal(ks[7], (n_outputs,), jnp.float32)

    # PyTorch tap k multiplies x[l - (K-1-k)*d] after the causal left pad; flip
    # so that kernel tap k multiplies x[l - k*d]. Layout is (K, C_out, C_in)
    # with channels on sublanes (time lives on lanes inside the kernel).
    w1 = jnp.transpose(jnp.flip(_weight_norm(v1, g1)[:, :, 0, :], axis=-1), (2, 0, 1))
    w2 = jnp.transpose(jnp.flip(_weight_norm(v2, g2)[:, :, 0, :], axis=-1), (2, 0, 1))
    wd = wd_v[:, :, 0]                                           # (C_out, C_in)

    to_bf16 = lambda a: a.astype(jnp.bfloat16)
    col = lambda b: b.reshape(-1, 1).astype(jnp.float32)         # (C_out, 1)
    return (to_bf16(w1), col(b1), to_bf16(w2), col(b2), to_bf16(wd), col(bd))


# ---------------------------------------------------------------------------
# Pure-JAX reference (same math & precision recipe, independent implementation)
# ---------------------------------------------------------------------------
def reference_forward(x_ncl, w1, b1, w2, b2, wd, bd, *, dilation, has_downsample):
    N, C_in, L = x_ncl.shape
    K = w1.shape[0]
    P = (K - 1) * dilation
    x = x_ncl.astype(jnp.bfloat16)

    def causal_conv(inp, w, b):                  # (N, C, L) -> (N, C_out, L) f32
        xp = jnp.pad(inp.astype(jnp.float32), ((0, 0), (0, 0), (P, 0)))
        acc = jnp.zeros((N, w.shape[1], L), jnp.float32) + b[None]
        for k in range(K):
            start = P - k * dilation             # xp[:, :, start + l] == x[l - k*d]
            acc = acc + jnp.einsum('oc,ncl->nol', w[k].astype(jnp.float32),
                                   xp[:, :, start:start + L])
        return acc

    h = jax.nn.relu(causal_conv(x, w1, b1)).astype(jnp.bfloat16)
    out = jax.nn.relu(causal_conv(h, w2, b2))
    if has_downsample:
        res = jnp.einsum('oc,ncl->nol', wd.astype(jnp.float32),
                         x.astype(jnp.float32)) + bd[None]
    else:
        res = x.astype(jnp.float32)
    return jax.nn.relu(out + res)


if __name__ == "__main__":
    # Small shapes implied by the module: x is (batch, n_inputs, seq_len).
    N, C_in, C_out, L = 2, 4, 8, 16
    kernel_size, stride, dilation = 3, 1, 2
    padding = (kernel_size - 1) * dilation                       # causal pad = 4

    key = jax.random.PRNGKey(0)
    kx, kp = jax.random.split(key)
    x = jax.random.normal(kx, (N, C_in, L), jnp.float32)

    w1, b1, w2, b2, wd, bd = make_params(kp, C_in, C_out, kernel_size)

    out = temporal_block_forward(
        x, w1, b1, w2, b2, wd, bd,
        kernel_size=kernel_size, stride=stride, dilation=dilation,
        padding=padding, has_downsample=(C_in != C_out))
    out = jax.block_until_ready(out)

    ref = reference_forward(x, w1, b1, w2, b2, wd, bd,
                            dilation=dilation, has_downsample=(C_in != C_out))
    assert out.shape == (N, C_out, L)
    # bf16 operands (f32 accumulation) -> loosened tolerance per review.
    assert jnp.allclose(out, ref, atol=1e-2, rtol=1e-2), "mismatch vs reference"

    print("KERNEL_OK")
</pallas_src>

<mosaic_0001>
module attributes {stable_mosaic.version = 11 : i64} {
  func.func @_temporal_block_kernel(%arg0: i32, %arg1: memref<2x4x16xbf16, #tpu.memory_space<vmem>>, %arg2: memref<3x8x4xbf16, #tpu.memory_space<vmem>>, %arg3: memref<8x1xf32, #tpu.memory_space<vmem>>, %arg4: memref<3x8x8xbf16, #tpu.memory_space<vmem>>, %arg5: memref<8x1xf32, #tpu.memory_space<vmem>>, %arg6: memref<8x4xbf16, #tpu.memory_space<vmem>>, %arg7: memref<8x1xf32, #tpu.memory_space<vmem>>, %arg8: memref<2x8x16xf32, #tpu.memory_space<vmem>>) attributes {dimension_semantics = [#tpu.dimension_semantics<parallel>], iteration_bounds = array<i64: 1>, scalar_prefetch = 0 : i64, scratch_operands = 0 : i64, tpu.core_type = #tpu.core_type<tc>, window_params = [{transform_indices = @transform_0, window_bounds = array<i64: 2, 4, 16>}, {pipeline_mode = #tpu.pipeline_mode<synchronous>, transform_indices = @transform_1, window_bounds = array<i64: 3, 8, 4>}, {pipeline_mode = #tpu.pipeline_mode<synchronous>, transform_indices = @transform_2, window_bounds = array<i64: 8, 1>}, {pipeline_mode = #tpu.pipeline_mode<synchronous>, transform_indices = @transform_3, window_bounds = array<i64: 3, 8, 8>}, {pipeline_mode = #tpu.pipeline_mode<synchronous>, transform_indices = @transform_4, window_bounds = array<i64: 8, 1>}, {pipeline_mode = #tpu.pipeline_mode<synchronous>, transform_indices = @transform_5, window_bounds = array<i64: 8, 4>}, {pipeline_mode = #tpu.pipeline_mode<synchronous>, transform_indices = @transform_6, window_bounds = array<i64: 8, 1>}, {transform_indices = @transform_7, window_bounds = array<i64: 2, 8, 16>}]} {
    %c0 = arith.constant 0 : index
    %c0_0 = arith.constant 0 : index
    %c0_1 = arith.constant 0 : index
    %0 = vector.load %arg1[%c0, %c0_0, %c0_1] : memref<2x4x16xbf16, #tpu.memory_space<vmem>>, vector<1x4x16xbf16>
    %1 = vector.shape_cast %0 : vector<1x4x16xbf16> to vector<4x16xbf16>
    %c0_2 = arith.constant 0 : index
    %c0_3 = arith.constant 0 : index
    %2 = vector.load %arg3[%c0_2, %c0_3] : memref<8x1xf32, #tpu.memory_space<vmem>>, vector<8x1xf32>
    %c0_4 = arith.constant 0 : index
    %c0_5 = arith.constant 0 : index
    %c0_6 = arith.constant 0 : index
    %3 = vector.load %arg2[%c0_4, %c0_5, %c0_6] : memref<3x8x4xbf16, #tpu.memory_space<vmem>>, vector<1x8x4xbf16>
    %4 = vector.shape_cast %3 : vector<1x8x4xbf16> to vector<8x4xbf16>
    %cst = arith.constant dense<0.000000e+00> : vector<8x16xf32>
    %5 = tpu.matmul %4, %1, %cst {dimension_numbers = #tpu.dot_dimension_numbers<[1], [0], [0], [1], [0, 0, 1, 1], [], []>} : vector<8x4xbf16>, vector<4x16xbf16>, vector<8x16xf32> -> vector<8x16xf32>
    %6 = vector.broadcast %2 : vector<8x1xf32> to vector<8x16xf32>
    %7 = arith.addf %6, %5 : vector<8x16xf32>
    %c1 = arith.constant 1 : index
    %c0_7 = arith.constant 0 : index
    %c0_8 = arith.constant 0 : index
    %8 = vector.load %arg2[%c1, %c0_7, %c0_8] : memref<3x8x4xbf16, #tpu.memory_space<vmem>>, vector<1x8x4xbf16>
    %9 = vector.shape_cast %8 : vector<1x8x4xbf16> to vector<8x4xbf16>
    %cst_9 = arith.constant dense<0.000000e+00> : vector<8x16xf32>
    %10 = tpu.matmul %9, %1, %cst_9 {dimension_numbers = #tpu.dot_dimension_numbers<[1], [0], [0], [1], [0, 0, 1, 1], [], []>} : vector<8x4xbf16>, vector<4x16xbf16>, vector<8x16xf32> -> vector<8x16xf32>
    %cst_10 = arith.constant 0.000000e+00 : f32
    %11 = vector.broadcast %cst_10 : f32 to vector<8x2xf32>
    %12 = vector.extract_strided_slice %10 {offsets = [0, 0], sizes = [8, 14], strides = [1, 1]} : vector<8x16xf32> to vector<8x14xf32>
    %13 = tpu.concatenate %11, %12 in 1 : vector<8x2xf32>, vector<8x14xf32> -> vector<8x16xf32>
    %14 = arith.addf %7, %13 : vector<8x16xf32>
    %c2 = arith.constant 2 : index
    %c0_11 = arith.constant 0 : index
    %c0_12 = arith.constant 0 : index
    %15 = vector.load %arg2[%c2, %c0_11, %c0_12] : memref<3x8x4xbf16, #tpu.memory_space<vmem>>, vector<1x8x4xbf16>
    %16 = vector.shape_cast %15 : vector<1x8x4xbf16> to vector<8x4xbf16>
    %cst_13 = arith.constant dense<0.000000e+00> : vector<8x16xf32>
    %17 = tpu.matmul %16, %1, %cst_13 {dimension_numbers = #tpu.dot_dimension_numbers<[1], [0], [0], [1], [0, 0, 1, 1], [], []>} : vector<8x4xbf16>, vector<4x16xbf16>, vector<8x16xf32> -> vector<8x16xf32>
    %cst_14 = arith.constant 0.000000e+00 : f32
    %18 = vector.broadcast %cst_14 : f32 to vector<8x4xf32>
    %19 = vector.extract_strided_slice %17 {offsets = [0, 0], sizes = [8, 12], strides = [1, 1]} : vector<8x16xf32> to vector<8x12xf32>
    %20 = tpu.concatenate %18, %19 in 1 : vector<8x4xf32>, vector<8x12xf32> -> vector<8x16xf32>
    %21 = arith.addf %14, %20 : vector<8x16xf32>
    %cst_15 = arith.constant 0.000000e+00 : f32
    %22 = vector.broadcast %cst_15 : f32 to vector<8x16xf32>
    %23 = arith.maximumf %21, %22 : vector<8x16xf32>
    %24 = arith.truncf %23 : vector<8x16xf32> to vector<8x16xbf16>
    %c0_16 = arith.constant 0 : index
    %c0_17 = arith.constant 0 : index
    %25 = vector.load %arg5[%c0_16, %c0_17] : memref<8x1xf32, #tpu.memory_space<vmem>>, vector<8x1xf32>
    %c0_18 = arith.constant 0 : index
    %c0_19 = arith.constant 0 : index
    %c0_20 = arith.constant 0 : index
    %26 = vector.load %arg4[%c0_18, %c0_19, %c0_20] : memref<3x8x8xbf16, #tpu.memory_space<vmem>>, vector<1x8x8xbf16>
    %27 = vector.shape_cast %26 : vector<1x8x8xbf16> to vector<8x8xbf16>
    %cst_21 = arith.constant dense<0.000000e+00> : vector<8x16xf32>
    %28 = tpu.matmul %27, %24, %cst_21 {dimension_numbers = #tpu.dot_dimension_numbers<[1], [0], [0], [1], [0, 0, 1, 1], [], []>} : vector<8x8xbf16>, vector<8x16xbf16>, vector<8x16xf32> -> vector<8x16xf32>
    %29 = vector.broadcast %25 : vector<8x1xf32> to vector<8x16xf32>
    %30 = arith.addf %29, %28 : vector<8x16xf32>
    %c1_22 = arith.constant 1 : index
    %c0_23 = arith.constant 0 : index
    %c0_24 = arith.constant 0 : index
    %31 = vector.load %arg4[%c1_22, %c0_23, %c0_24] : memref<3x8x8xbf16, #tpu.memory_space<vmem>>, vector<1x8x8xbf16>
    %32 = vector.shape_cast %31 : vector<1x8x8xbf16> to vector<8x8xbf16>
    %cst_25 = arith.constant dense<0.000000e+00> : vector<8x16xf32>
    %33 = tpu.matmul %32, %24, %cst_25 {dimension_numbers = #tpu.dot_dimension_numbers<[1], [0], [0], [1], [0, 0, 1, 1], [], []>} : vector<8x8xbf16>, vector<8x16xbf16>, vector<8x16xf32> -> vector<8x16xf32>
    %cst_26 = arith.constant 0.000000e+00 : f32
    %34 = vector.broadcast %cst_26 : f32 to vector<8x2xf32>
    %35 = vector.extract_strided_slice %33 {offsets = [0, 0], sizes = [8, 14], strides = [1, 1]} : vector<8x16xf32> to vector<8x14xf32>
    %36 = tpu.concatenate %34, %35 in 1 : vector<8x2xf32>, vector<8x14xf32> -> vector<8x16xf32>
    %37 = arith.addf %30, %36 : vector<8x16xf32>
    %c2_27 = arith.constant 2 : index
    %c0_28 = arith.constant 0 : index
    %c0_29 = arith.constant 0 : index
    %38 = vector.load %arg4[%c2_27, %c0_28, %c0_29] : memref<3x8x8xbf16, #tpu.memory_space<vmem>>, vector<1x8x8xbf16>
    %39 = vector.shape_cast %38 : vector<1x8x8xbf16> to vector<8x8xbf16>
    %cst_30 = arith.constant dense<0.000000e+00> : vector<8x16xf32>
    %40 = tpu.matmul %39, %24, %cst_30 {dimension_numbers = #tpu.dot_dimension_numbers<[1], [0], [0], [1], [0, 0, 1, 1], [], []>} : vector<8x8xbf16>, vector<8x16xbf16>, vector<8x16xf32> -> vector<8x16xf32>
    %cst_31 = arith.constant 0.000000e+00 : f32
    %41 = vector.broadcast %cst_31 : f32 to vector<8x4xf32>
    %42 = vector.extract_strided_slice %40 {offsets = [0, 0], sizes = [8, 12], strides = [1, 1]} : vector<8x16xf32> to vector<8x12xf32>
    %43 = tpu.concatenate %41, %42 in 1 : vector<8x4xf32>, vector<8x12xf32> -> vector<8x16xf32>
    %44 = arith.addf %37, %43 : vector<8x16xf32>
    %cst_32 = arith.constant 0.000000e+00 : f32
    %45 = vector.broadcast %cst_32 : f32 to vector<8x16xf32>
    %46 = arith.maximumf %44, %45 : vector<8x16xf32>
    %c0_33 = arith.constant 0 : index
    %c0_34 = arith.constant 0 : index
    %47 = vector.load %arg6[%c0_33, %c0_34] : memref<8x4xbf16, #tpu.memory_space<vmem>>, vector<8x4xbf16>
    %cst_35 = arith.constant dense<0.000000e+00> : vector<8x16xf32>
    %48 = tpu.matmul %47, %1, %cst_35 {dimension_numbers = #tpu.dot_dimension_numbers<[1], [0], [0], [1], [0, 0, 1, 1], [], []>} : vector<8x4xbf16>, vector<4x16xbf16>, vector<8x16xf32> -> vector<8x16xf32>
    %c0_36 = arith.constant 0 : index
    %c0_37 = arith.constant 0 : index
    %49 = vector.load %arg7[%c0_36, %c0_37] : memref<8x1xf32, #tpu.memory_space<vmem>>, vector<8x1xf32>
    %50 = vector.broadcast %49 : vector<8x1xf32> to vector<8x16xf32>
    %51 = arith.addf %48, %50 : vector<8x16xf32>
    %52 = arith.addf %46, %51 : vector<8x16xf32>
    %cst_38 = arith.constant 0.000000e+00 : f32
    %53 = vector.broadcast %cst_38 : f32 to vector<8x16xf32>
    %54 = arith.maximumf %52, %53 : vector<8x16xf32>
    %c0_39 = arith.constant 0 : index
    %c0_40 = arith.constant 0 : index
    %c0_41 = arith.constant 0 : index
    %55 = vector.load %arg8[%c0_39, %c0_40, %c0_41] : memref<2x8x16xf32, #tpu.memory_space<vmem>>, vector<1x8x16xf32>
    %56 = vector.shape_cast %55 : vector<1x8x16xf32> to vector<8x16xf32>
    %57 = vector.shape_cast %54 : vector<8x16xf32> to vector<1x8x16xf32>
    tpu.vector_store %arg8[%c0_39, %c0_40, %c0_41], %57 {strides = array<i32>} : memref<2x8x16xf32, #tpu.memory_space<vmem>>, vector<1x8x16xf32>,
    %c1_42 = arith.constant 1 : index
    %c0_43 = arith.constant 0 : index
    %c0_44 = arith.constant 0 : index
    %58 = vector.load %arg1[%c1_42, %c0_43, %c0_44] : memref<2x4x16xbf16, #tpu.memory_space<vmem>>, vector<1x4x16xbf16>
    %59 = vector.shape_cast %58 : vector<1x4x16xbf16> to vector<4x16xbf16>
    %c0_45 = arith.constant 0 : index
    %c0_46 = arith.constant 0 : index
    %60 = vector.load %arg3[%c0_45, %c0_46] : memref<8x1xf32, #tpu.memory_space<vmem>>, vector<8x1xf32>
    %c0_47 = arith.constant 0 : index
    %c0_48 = arith.constant 0 : index
    %c0_49 = arith.constant 0 : index
    %61 = vector.load %arg2[%c0_47, %c0_48, %c0_49] : memref<3x8x4xbf16, #tpu.memory_space<vmem>>, vector<1x8x4xbf16>
    %62 = vector.shape_cast %61 : vector<1x8x4xbf16> to vector<8x4xbf16>
    %cst_50 = arith.constant dense<0.000000e+00> : vector<8x16xf32>
    %63 = tpu.matmul %62, %59, %cst_50 {dimension_numbers = #tpu.dot_dimension_numbers<[1], [0], [0], [1], [0, 0, 1, 1], [], []>} : vector<8x4xbf16>, vector<4x16xbf16>, vector<8x16xf32> -> vector<8x16xf32>
    %64 = vector.broadcast %60 : vector<8x1xf32> to vector<8x16xf32>
    %65 = arith.addf %64, %63 : vector<8x16xf32>
    %c1_51 = arith.constant 1 : index
    %c0_52 = arith.constant 0 : index
    %c0_53 = arith.constant 0 : index
    %66 = vector.load %arg2[%c1_51, %c0_52, %c0_53] : memref<3x8x4xbf16, #tpu.memory_space<vmem>>, vector<1x8x4xbf16>
    %67 = vector.shape_cast %66 : vector<1x8x4xbf16> to vector<8x4xbf16>
    %cst_54 = arith.constant dense<0.000000e+00> : vector<8x16xf32>
    %68 = tpu.matmul %67, %59, %cst_54 {dimension_numbers = #tpu.dot_dimension_numbers<[1], [0], [0], [1], [0, 0, 1, 1], [], []>} : vector<8x4xbf16>, vector<4x16xbf16>, vector<8x16xf32> -> vector<8x16xf32>
    %cst_55 = arith.constant 0.000000e+00 : f32
    %69 = vector.broadcast %cst_55 : f32 to vector<8x2xf32>
    %70 = vector.extract_strided_slice %68 {offsets = [0, 0], sizes = [8, 14], strides = [1, 1]} : vector<8x16xf32> to vector<8x14xf32>
    %71 = tpu.concatenate %69, %70 in 1 : vector<8x2xf32>, vector<8x14xf32> -> vector<8x16xf32>
    %72 = arith.addf %65, %71 : vector<8x16xf32>
    %c2_56 = arith.constant 2 : index
    %c0_57 = arith.constant 0 : index
    %c0_58 = arith.constant 0 : index
    %73 = vector.load %arg2[%c2_56, %c0_57, %c0_58] : memref<3x8x4xbf16, #tpu.memory_space<vmem>>, vector<1x8x4xbf16>
    %74 = vector.shape_cast %73 : vector<1x8x4xbf16> to vector<8x4xbf16>
    %cst_59 = arith.constant dense<0.000000e+00> : vector<8x16xf32>
    %75 = tpu.matmul %74, %59, %cst_59 {dimension_numbers = #tpu.dot_dimension_numbers<[1], [0], [0], [1], [0, 0, 1, 1], [], []>} : vector<8x4xbf16>, vector<4x16xbf16>, vector<8x16xf32> -> vector<8x16xf32>
    %cst_60 = arith.constant 0.000000e+00 : f32
    %76 = vector.broadcast %cst_60 : f32 to vector<8x4xf32>
    %77 = vector.extract_strided_slice %75 {offsets = [0, 0], sizes = [8, 12], strides = [1, 1]} : vector<8x16xf32> to vector<8x12xf32>
    %78 = tpu.concatenate %76, %77 in 1 : vector<8x4xf32>, vector<8x12xf32> -> vector<8x16xf32>
    %79 = arith.addf %72, %78 : vector<8x16xf32>
    %cst_61 = arith.constant 0.000000e+00 : f32
    %80 = vector.broadcast %cst_61 : f32 to vector<8x16xf32>
    %81 = arith.maximumf %79, %80 : vector<8x16xf32>
    %82 = arith.truncf %81 : vector<8x16xf32> to vector<8x16xbf16>
    %c0_62 = arith.constant 0 : index
    %c0_63 = arith.constant 0 : index
    %83 = vector.load %arg5[%c0_62, %c0_63] : memref<8x1xf32, #tpu.memory_space<vmem>>, vector<8x1xf32>
    %c0_64 = arith.constant 0 : index
    %c0_65 = arith.constant 0 : index
    %c0_66 = arith.constant 0 : index
    %84 = vector.load %arg4[%c0_64, %c0_65, %c0_66] : memref<3x8x8xbf16, #tpu.memory_space<vmem>>, vector<1x8x8xbf16>
    %85 = vector.shape_cast %84 : vector<1x8x8xbf16> to vector<8x8xbf16>
    %cst_67 = arith.constant dense<0.000000e+00> : vector<8x16xf32>
    %86 = tpu.matmul %85, %82, %cst_67 {dimension_numbers = #tpu.dot_dimension_numbers<[1], [0], [0], [1], [0, 0, 1, 1], [], []>} : vector<8x8xbf16>, vector<8x16xbf16>, vector<8x16xf32> -> vector<8x16xf32>
    %87 = vector.broadcast %83 : vector<8x1xf32> to vector<8x16xf32>
    %88 = arith.addf %87, %86 : vector<8x16xf32>
    %c1_68 = arith.constant 1 : index
    %c0_69 = arith.constant 0 : index
    %c0_70 = arith.constant 0 : index
    %89 = vector.load %arg4[%c1_68, %c0_69, %c0_70] : memref<3x8x8xbf16, #tpu.memory_space<vmem>>, vector<1x8x8xbf16>
    %90 = vector.shape_cast %89 : vector<1x8x8xbf16> to vector<8x8xbf16>
    %cst_71 = arith.constant dense<0.000000e+00> : vector<8x16xf32>
    %91 = tpu.matmul %90, %82, %cst_71 {dimension_numbers = #tpu.dot_dimension_numbers<[1], [0], [0], [1], [0, 0, 1, 1], [], []>} : vector<8x8xbf16>, vector<8x16xbf16>, vector<8x16xf32> -> vector<8x16xf32>
    %cst_72 = arith.constant 0.000000e+00 : f32
    %92 = vector.broadcast %cst_72 : f32 to vector<8x2xf32>
    %93 = vector.extract_strided_slice %91 {offsets = [0, 0], sizes = [8, 14], strides = [1, 1]} : vector<8x16xf32> to vector<8x14xf32>
    %94 = tpu.concatenate %92, %93 in 1 : vector<8x2xf32>, vector<8x14xf32> -> vector<8x16xf32>
    %95 = arith.addf %88, %94 : vector<8x16xf32>
    %c2_73 = arith.constant 2 : index
    %c0_74 = arith.constant 0 : index
    %c0_75 = arith.constant 0 : index
    %96 = vector.load %arg4[%c2_73, %c0_74, %c0_75] : memref<3x8x8xbf16, #tpu.memory_space<vmem>>, vector<1x8x8xbf16>
    %97 = vector.shape_cast %96 : vector<1x8x8xbf16> to vector<8x8xbf16>
    %cst_76 = arith.constant dense<0.000000e+00> : vector<8x16xf32>
    %98 = tpu.matmul %97, %82, %cst_76 {dimension_numbers = #tpu.dot_dimension_numbers<[1], [0], [0], [1], [0, 0, 1, 1], [], []>} : vector<8x8xbf16>, vector<8x16xbf16>, vector<8x16xf32> -> vector<8x16xf32>
    %cst_77 = arith.constant 0.000000e+00 : f32
    %99 = vector.broadcast %cst_77 : f32 to vector<8x4xf32>
    %100 = vector.extract_strided_slice %98 {offsets = [0, 0], sizes = [8, 12], strides = [1, 1]} : vector<8x16xf32> to vector<8x12xf32>
    %101 = tpu.concatenate %99, %100 in 1 : vector<8x4xf32>, vector<8x12xf32> -> vector<8x16xf32>
    %102 = arith.addf %95, %101 : vector<8x16xf32>
    %cst_78 = arith.constant 0.000000e+00 : f32
    %103 = vector.broadcast %cst_78 : f32 to vector<8x16xf32>
    %104 = arith.maximumf %102, %103 : vector<8x16xf32>
    %c0_79 = arith.constant 0 : index
    %c0_80 = arith.constant 0 : index
    %105 = vector.load %arg6[%c0_79, %c0_80] : memref<8x4xbf16, #tpu.memory_space<vmem>>, vector<8x4xbf16>
    %cst_81 = arith.constant dense<0.000000e+00> : vector<8x16xf32>
    %106 = tpu.matmul %105, %59, %cst_81 {dimension_numbers = #tpu.dot_dimension_numbers<[1], [0], [0], [1], [0, 0, 1, 1], [], []>} : vector<8x4xbf16>, vector<4x16xbf16>, vector<8x16xf32> -> vector<8x16xf32>
    %c0_82 = arith.constant 0 : index
    %c0_83 = arith.constant 0 : index
    %107 = vector.load %arg7[%c0_82, %c0_83] : memref<8x1xf32, #tpu.memory_space<vmem>>, vector<8x1xf32>
    %108 = vector.broadcast %107 : vector<8x1xf32> to vector<8x16xf32>
    %109 = arith.addf %106, %108 : vector<8x16xf32>
    %110 = arith.addf %104, %109 : vector<8x16xf32>
    %cst_84 = arith.constant 0.000000e+00 : f32
    %111 = vector.broadcast %cst_84 : f32 to vector<8x16xf32>
    %112 = arith.maximumf %110, %111 : vector<8x16xf32>
    %c1_85 = arith.constant 1 : index
    %c0_86 = arith.constant 0 : index
    %c0_87 = arith.constant 0 : index
    %113 = vector.load %arg8[%c1_85, %c0_86, %c0_87] : memref<2x8x16xf32, #tpu.memory_space<vmem>>, vector<1x8x16xf32>
    %114 = vector.shape_cast %113 : vector<1x8x16xf32> to vector<8x16xf32>
    %115 = vector.shape_cast %112 : vector<8x16xf32> to vector<1x8x16xf32>
    tpu.vector_store %arg8[%c1_85, %c0_86, %c0_87], %115 {strides = array<i32>} : memref<2x8x16xf32, #tpu.memory_space<vmem>>, vector<1x8x16xf32>,
    return
  }
  func.func @transform_0(%arg0: i32) -> (i32, i32, i32) {
    %c0_i32 = arith.constant 0 : i32
    %c0_i32_0 = arith.constant 0 : i32
    %c0_i32_1 = arith.constant 0 : i32
    return %arg0, %c0_i32, %c0_i32_0 : i32, i32, i32
  }
  func.func @transform_1(%arg0: i32) -> (i32, i32, i32) {
    %c0_i32 = arith.constant 0 : i32
    %c0_i32_0 = arith.constant 0 : i32
    %c0_i32_1 = arith.constant 0 : i32
    %c0_i32_2 = arith.constant 0 : i32
    return %c0_i32, %c0_i32_0, %c0_i32_1 : i32, i32, i32
  }
  func.func @transform_2(%arg0: i32) -> (i32, i32) {
    %c0_i32 = arith.constant 0 : i32
    %c0_i32_0 = arith.constant 0 : i32
    %c0_i32_1 = arith.constant 0 : i32
    return %c0_i32, %c0_i32_0 : i32, i32
  }
  func.func @transform_3(%arg0: i32) -> (i32, i32, i32) {
    %c0_i32 = arith.constant 0 : i32
    %c0_i32_0 = arith.constant 0 : i32
    %c0_i32_1 = arith.constant 0 : i32
    %c0_i32_2 = arith.constant 0 : i32
    return %c0_i32, %c0_i32_0, %c0_i32_1 : i32, i32, i32
  }
  func.func @transform_4(%arg0: i32) -> (i32, i32) {
    %c0_i32 = arith.constant 0 : i32
    %c0_i32_0 = arith.constant 0 : i32
    %c0_i32_1 = arith.constant 0 : i32
    return %c0_i32, %c0_i32_0 : i32, i32
  }
  func.func @transform_5(%arg0: i32) -> (i32, i32) {
    %c0_i32 = arith.constant 0 : i32
    %c0_i32_0 = arith.constant 0 : i32
    %c0_i32_1 = arith.constant 0 : i32
    return %c0_i32, %c0_i32_0 : i32, i32
  }
  func.func @transform_6(%arg0: i32) -> (i32, i32) {
    %c0_i32 = arith.constant 0 : i32
    %c0_i32_0 = arith.constant 0 : i32
    %c0_i32_1 = arith.constant 0 : i32
    return %c0_i32, %c0_i32_0 : i32, i32
  }
  func.func @transform_7(%arg0: i32) -> (i32, i32, i32) {
    %c0_i32 = arith.constant 0 : i32
    %c0_i32_0 = arith.constant 0 : i32
    %c0_i32_1 = arith.constant 0 : i32
    return %arg0, %c0_i32, %c0_i32_0 : i32, i32, i32
  }
}

</mosaic_0001>

<llo_original>
// kernel: tpu_custom_call.1
$region0: #{tpu_custom_call.1}
  #allocation0 [shape = 'u32[]', space=smem, size = 0x4, offset = 0x4, fixed_abs, tag = 'smem constant byte address 0x4 - core index']
  #allocation1 [shape = 'u32[144,128]{1,0:T(1,128)}', space=vmem, size = 0x12000, scoped, tag = 'internal scratch']
  %s0 = inlined_call_operand.vmem [shape: bf16[2,4,16], index: 0, kind: input, shape index: {}]
  %s1 = inlined_call_operand.vmem [shape: bf16[3,8,4], index: 1, kind: input, shape index: {}]
  %s2 = inlined_call_operand.vmem [shape: f32[8,1], index: 2, kind: input, shape index: {}]
  %s3 = inlined_call_operand.vmem [shape: bf16[3,8,8], index: 3, kind: input, shape index: {}]
  %s4 = inlined_call_operand.vmem [shape: f32[8,1], index: 4, kind: input, shape index: {}]
  %s5 = inlined_call_operand.vmem [shape: bf16[8,4], index: 5, kind: input, shape index: {}]
  %s6 = inlined_call_operand.vmem [shape: f32[8,1], index: 6, kind: input, shape index: {}]
  %s7 = inlined_call_operand.hbm [shape: f32[2,8,16], index: 7, kind: output, shape index: {}]
  %s8 = sld [smem:[#allocation0]]
  $region38: #{tpu_custom_call.1} parent=0
    _
  %s10 = ssub.s32 1, %s8
  %s11 = scalar_select 0, %s10, %s8
  $region1: #{tpu_custom_call.1} parent=0
    #allocation2 [shape = 'u8[8192]{0}', space=vmem, size = 0x2000, scoped, tag = 'output window, operand 0, single buffered']
    #allocation3 [shape = 's32[1]{0}', space=sflag, size = 0x4, scoped, tag = 'scoped memory for tpu_custom_call.1']
    %12 = vsyncpa [#allocation3], 0
    // Predicated region
    $region2: #{tpu_custom_call.1} parent=1 // pred_check
      _
    $region3: #{tpu_custom_call.1} parent=1 // pred_check_branch
      %14 = sbr.rel (0) target = $region5
    $region4: #{tpu_custom_call.1} parent=1 // pred_region
      _
    $region5: #{tpu_custom_call.1} parent=1 // pred_fallthru
      _
    // Predicated region
    $region6: #{tpu_custom_call.1} parent=1 // pred_check
      _
    $region7: #{tpu_custom_call.1} parent=1 // pred_check_branch
      %16 = sbr.rel (0) target = $region9
    $region8: #{tpu_custom_call.1} parent=1 // pred_region
      _
    $region9: #{tpu_custom_call.1} parent=1 // pred_fallthru
      _
    // Predicated region
    $region10: #{tpu_custom_call.1} parent=1 // pred_check
      _
    $region11: #{tpu_custom_call.1} parent=1 // pred_check_branch
      %18 = sbr.rel (0) target = $region13
    $region12: #{tpu_custom_call.1} parent=1 // pred_region
      _
    $region13: #{tpu_custom_call.1} parent=1 // pred_fallthru
      _
    // Predicated region
    $region14: #{tpu_custom_call.1} parent=1 // pred_check
      _
    $region15: #{tpu_custom_call.1} parent=1 // pred_check_branch
      %20 = sbr.rel (0) target = $region17
    $region16: #{tpu_custom_call.1} parent=1 // pred_region
      _
    $region17: #{tpu_custom_call.1} parent=1 // pred_fallthru
      _
    // Predicated region
    $region18: #{tpu_custom_call.1} parent=1 // pred_check
      _
    $region19: #{tpu_custom_call.1} parent=1 // pred_check_branch
      %22 = sbr.rel (0) target = $region21
    $region20: #{tpu_custom_call.1} parent=1 // pred_region
      _
    $region21: #{tpu_custom_call.1} parent=1 // pred_fallthru
      _
    // Predicated region
    $region22: #{tpu_custom_call.1} parent=1 // pred_check
      _
    $region23: #{tpu_custom_call.1} parent=1 // pred_check_branch
      %24 = sbr.rel (0) target = $region25
    $region24: #{tpu_custom_call.1} parent=1 // pred_region
      _
    $region25: #{tpu_custom_call.1} parent=1 // pred_fallthru
      _
    // Predicated region
    $region26: #{tpu_custom_call.1} parent=1 // pred_check
      _
    $region27: #{tpu_custom_call.1} parent=1 // pred_check_branch
      %26 = sbr.rel (0) target = $region29
    $region28: #{tpu_custom_call.1} parent=1 // pred_region
      _
    $region29: #{tpu_custom_call.1} parent=1 // pred_fallthru
      _
    %v28 = vld [vmem:[%s0] sm:$0x3]
    %v29 = vld [vmem:[%s2] sm:$0xff]
    %v30 = vld [vmem:[%s1] sm:$0xf]
    %vm31 = vcmask 31744
    %v33 = vsel %vm31, %v30, 0
    %vm35 = vcmask 1041408
    %v37 = vsel %vm35, %v28, 0
    %39 = vmatprep.subr.bf16.mxu0 0
    %40 = vmatpush1.bf16.msra.mxu0 %v37
    %41 = vmatprep.subr.bf16.mxu0 0
    %42 = vmatpush1.bf16.msra.mxu0 0
    %43 = vmatprep.subr.bf16.mxu0 0
    %44 = vmatpush1.bf16.msra.mxu0 0
    %45 = vmatprep.subr.bf16.mxu0 0
    %46 = vmatpush1.bf16.msra.mxu0 0
    %47 = vmatprep.subr.bf16.mxu0 0
    %48 = vmatpush1.bf16.msra.mxu0 0
    %49 = vmatprep.subr.bf16.mxu0 0
    %50 = vmatpush1.bf16.msra.mxu0 0
    %51 = vmatprep.subr.bf16.mxu0 0
    %52 = vmatpush1.bf16.msra.mxu0 0
    %53 = vmatprep.subr.bf16.mxu0 0
    %54 = vmatpush1.bf16.msra.mxu0 0
    %55 = vmatprep.subr.bf16.mxu0 0
    %56 = vmatpush1.bf16.msra.mxu0 0
    %57 = vmatprep.subr.bf16.mxu0 0
    %58 = vmatpush1.bf16.msra.mxu0 0
    %59 = vmatprep.subr.bf16.mxu0 0
    %60 = vmatpush1.bf16.msra.mxu0 0
    %61 = vmatprep.subr.bf16.mxu0 0
    %62 = vmatpush1.bf16.msra.mxu0 0
    %63 = vmatprep.subr.bf16.mxu0 0
    %64 = vmatpush1.bf16.msra.mxu0 0
    %65 = vmatprep.subr.bf16.mxu0 0
    %66 = vmatpush1.bf16.msra.mxu0 0
    %67 = vmatprep.subr.bf16.mxu0 0
    %68 = vmatpush1.bf16.msra.mxu0 0
    %69 = vmatprep.subr.bf16.mxu0 0
    %70 = vmatpush1.bf16.msra.mxu0 0
    %71 = vmatprep.mubr.bf16.mxu0 0
    %72 = vmatmul.mubr.bf16.gmra.mrb[0].mxu0 %v33
    %v73 = vpop.f32.mrb[0].mxu0
    %v74 = vadd.f32 0.0, %v73
    %v75 = vpop.f32.mrb[0].mxu0
    %v76 = vpop.f32.mrb[0].mxu0
    %v77 = vpop.f32.mrb[0].mxu0
    %78 = vdwg.mxu0
    %80 = vset.pattern.permute.xlu0 0
    %81 = vperm.xlu0 %80, %v29
    %v82 = vpop.permute.xlu0 %81
    %v84 = vadd.f32 %v82, %v74
    %s85 = scalar_lea.vmem %s1, 4
    %v86 = vld [vmem:[%s85] sm:$0xf]
    %v88 = vsel %vm31, %v86, 0
    %90 = vmatprep.subr.bf16.mxu0 0
    %91 = vmatpush1.bf16.msra.mxu0 %v37
    %92 = vmatprep.subr.bf16.mxu0 0
    %93 = vmatpush1.bf16.msra.mxu0 0
    %94 = vmatprep.subr.bf16.mxu0 0
    %95 = vmatpush1.bf16.msra.mxu0 0
    %96 = vmatprep.subr.bf16.mxu0 0
    %97 = vmatpush1.bf16.msra.mxu0 0
    %98 = vmatprep.subr.bf16.mxu0 0
    %99 = vmatpush1.bf16.msra.mxu0 0
    %100 = vmatprep.subr.bf16.mxu0 0
    %101 = vmatpush1.bf16.msra.mxu0 0
    %102 = vmatprep.subr.bf16.mxu0 0
    %103 = vmatpush1.bf16.msra.mxu0 0
    %104 = vmatprep.subr.bf16.mxu0 0
    %105 = vmatpush1.bf16.msra.mxu0 0
    %106 = vmatprep.subr.bf16.mxu0 0
    %107 = vmatpush1.bf16.msra.mxu0 0
    %108 = vmatprep.subr.bf16.mxu0 0
    %109 = vmatpush1.bf16.msra.mxu0 0
    %110 = vmatprep.subr.bf16.mxu0 0
    %111 = vmatpush1.bf16.msra.mxu0 0
    %112 = vmatprep.subr.bf16.mxu0 0
    %113 = vmatpush1.bf16.msra.mxu0 0
    %114 = vmatprep.subr.bf16.mxu0 0
    %115 = vmatpush1.bf16.msra.mxu0 0
    %116 = vmatprep.subr.bf16.mxu0 0
    %117 = vmatpush1.bf16.msra.mxu0 0
    %118 = vmatprep.subr.bf16.mxu0 0
    %119 = vmatpush1.bf16.msra.mxu0 0
    %120 = vmatprep.subr.bf16.mxu0 0
    %121 = vmatpush1.bf16.msra.mxu0 0
    %122 = vmatprep.mubr.bf16.mxu0 0
    %123 = vmatmul.mubr.bf16.gmra.mrb[0].mxu0 %v88
    %v124 = vpop.f32.mrb[0].mxu0
    %v125 = vadd.f32 0.0, %v124
    %v126 = vpop.f32.mrb[0].mxu0
    %v127 = vpop.f32.mrb[0].mxu0
    %v128 = vpop.f32.mrb[0].mxu0
    %129 = vdwg.mxu0
    %131 = vrot.lane.b32.xlu0 %v125, 2
    %v132 = vpop.permute.xlu0 %131
    %vm134 = vcmask 15360
    %v135 = vsel %vm134, 0.0, %v132
    %v136 = vadd.f32 %v84, %v135
    %s137 = scalar_lea.vmem %s1, 8
    %v138 = vld [vmem:[%s137] sm:$0xf]
    %v140 = vsel %vm31, %v138, 0
    %142 = vmatprep.subr.bf16.mxu0 0
    %143 = vmatpush1.bf16.msra.mxu0 %v37
    %144 = vmatprep.subr.bf16.mxu0 0
    %145 = vmatpush1.bf16.msra.mxu0 0
    %146 = vmatprep.subr.bf16.mxu0 0
    %147 = vmatpush1.bf16.msra.mxu0 0
    %148 = vmatprep.subr.bf16.mxu0 0
    %149 = vmatpush1.bf16.msra.mxu0 0
    %150 = vmatprep.subr.bf16.mxu0 0
    %151 = vmatpush1.bf16.msra.mxu0 0
    %152 = vmatprep.subr.bf16.mxu0 0
    %153 = vmatpush1.bf16.msra.mxu0 0
    %154 = vmatprep.subr.bf16.mxu0 0
    %155 = vmatpush1.bf16.msra.mxu0 0
    %156 = vmatprep.subr.bf16.mxu0 0
    %157 = vmatpush1.bf16.msra.mxu0 0
    %158 = vmatprep.subr.bf16.mxu0 0
    %159 = vmatpush1.bf16.msra.mxu0 0
    %160 = vmatprep.subr.bf16.mxu0 0
    %161 = vmatpush1.bf16.msra.mxu0 0
    %162 = vmatprep.subr.bf16.mxu0 0
    %163 = vmatpush1.bf16.msra.mxu0 0
    %164 = vmatprep.subr.bf16.mxu0 0
    %165 = vmatpush1.bf16.msra.mxu0 0
    %166 = vmatprep.subr.bf16.mxu0 0
    %167 = vmatpush1.bf16.msra.mxu0 0
    %168 = vmatprep.subr.bf16.mxu0 0
    %169 = vmatpush1.bf16.msra.mxu0 0
    %170 = vmatprep.subr.bf16.mxu0 0
    %171 = vmatpush1.bf16.msra.mxu0 0
    %172 = vmatprep.subr.bf16.mxu0 0
    %173 = vmatpush1.bf16.msra.mxu0 0
    %174 = vmatprep.mubr.bf16.mxu0 0
    %175 = vmatmul.mubr.bf16.gmra.mrb[0].mxu0 %v140
    %v176 = vpop.f32.mrb[0].mxu0
    %v177 = vadd.f32 0.0, %v176
    %v178 = vpop.f32.mrb[0].mxu0
    %v179 = vpop.f32.mrb[0].mxu0
    %v180 = vpop.f32.mrb[0].mxu0
    %181 = vdwg.mxu0
    %183 = vrot.lane.b32.xlu0 %v177, 4
    %v184 = vpop.permute.xlu0 %183
    %v186 = vsel %vm31, 0.0, %v184
    %v187 = vadd.f32 %v136, %v186
    %v188 = vmax.f32 %v187, 0.0
    %v189 = vpack.c.bf16 %v188, %v188
    %v190 = vld [vmem:[%s4] sm:$0xff]
    %v191 = vld [vmem:[%s3] sm:$0xf]
    %vm192 = vcmask 64512
    %v194 = vsel %vm192, %v191, 0
    %vm196 = vcmask 1043456
    %v198 = vsel %vm196, %v189, 0
    %200 = vmatprep.subr.bf16.mxu0 0
    %201 = vmatpush1.bf16.msra.mxu0 %v198
    %202 = vmatprep.subr.bf16.mxu0 0
    %203 = vmatpush1.bf16.msra.mxu0 0
    %204 = vmatprep.subr.bf16.mxu0 0
    %205 = vmatpush1.bf16.msra.mxu0 0
    %206 = vmatprep.subr.bf16.mxu0 0
    %207 = vmatpush1.bf16.msra.mxu0 0
    %208 = vmatprep.subr.bf16.mxu0 0
    %209 = vmatpush1.bf16.msra.mxu0 0
    %210 = vmatprep.subr.bf16.mxu0 0
    %211 = vmatpush1.bf16.msra.mxu0 0
    %212 = vmatprep.subr.bf16.mxu0 0
    %213 = vmatpush1.bf16.msra.mxu0 0
    %214 = vmatprep.subr.bf16.mxu0 0
    %215 = vmatpush1.bf16.msra.mxu0 0
    %216 = vmatprep.subr.bf16.mxu0 0
    %217 = vmatpush1.bf16.msra.mxu0 0
    %218 = vmatprep.subr.bf16.mxu0 0
    %219 = vmatpush1.bf16.msra.mxu0 0
    %220 = vmatprep.subr.bf16.mxu0 0
    %221 = vmatpush1.bf16.msra.mxu0 0
    %222 = vmatprep.subr.bf16.mxu0 0
    %223 = vmatpush1.bf16.msra.mxu0 0
    %224 = vmatprep.subr.bf16.mxu0 0
    %225 = vmatpush1.bf16.msra.mxu0 0
    %226 = vmatprep.subr.bf16.mxu0 0
    %227 = vmatpush1.bf16.msra.mxu0 0
    %228 = vmatprep.subr.bf16.mxu0 0
    %229 = vmatpush1.bf16.msra.mxu0 0
    %230 = vmatprep.subr.bf16.mxu0 0
    %231 = vmatpush1.bf16.msra.mxu0 0
    %232 = vmatprep.mubr.bf16.mxu0 0
    %233 = vmatmul.mubr.bf16.gmra.mrb[0].mxu0 %v194
    %v234 = vpop.f32.mrb[0].mxu0
    %v235 = vadd.f32 0.0, %v234
    %v236 = vpop.f32.mrb[0].mxu0
    %v237 = vpop.f32.mrb[0].mxu0
    %v238 = vpop.f32.mrb[0].mxu0
    %239 = vdwg.mxu0
    %241 = vset.pattern.permute.xlu0 0
    %242 = vperm.xlu0 %241, %v190
    %v243 = vpop.permute.xlu0 %242
    %v245 = vadd.f32 %v243, %v235
    %s246 = scalar_lea.vmem %s3, 4
    %v247 = vld [vmem:[%s246] sm:$0xf]
    %v249 = vsel %vm192, %v247, 0
    %251 = vmatprep.subr.bf16.mxu0 0
    %252 = vmatpush1.bf16.msra.mxu0 %v198
    %253 = vmatprep.subr.bf16.mxu0 0
    %254 = vmatpush1.bf16.msra.mxu0 0
    %255 = vmatprep.subr.bf16.mxu0 0
    %256 = vmatpush1.bf16.msra.mxu0 0
    %257 = vmatprep.subr.bf16.mxu0 0
    %258 = vmatpush1.bf16.msra.mxu0 0
    %259 = vmatprep.subr.bf16.mxu0 0
    %260 = vmatpush1.bf16.msra.mxu0 0
    %261 = vmatprep.subr.bf16.mxu0 0
    %262 = vmatpush1.bf16.msra.mxu0 0
    %263 = vmatprep.subr.bf16.mxu0 0
    %264 = vmatpush1.bf16.msra.mxu0 0
    %265 = vmatprep.subr.bf16.mxu0 0
    %266 = vmatpush1.bf16.msra.mxu0 0
    %267 = vmatprep.subr.bf16.mxu0 0
    %268 = vmatpush1.bf16.msra.mxu0 0
    %269 = vmatprep.subr.bf16.mxu0 0
    %270 = vmatpush1.bf16.msra.mxu0 0
    %271 = vmatprep.subr.bf16.mxu0 0
    %272 = vmatpush1.bf16.msra.mxu0 0
    %273 = vmatprep.subr.bf16.mxu0 0
    %274 = vmatpush1.bf16.msra.mxu0 0
    %275 = vmatprep.subr.bf16.mxu0 0
    %276 = vmatpush1.bf16.msra.mxu0 0
    %277 = vmatprep.subr.bf16.mxu0 0
    %278 = vmatpush1.bf16.msra.mxu0 0
    %279 = vmatprep.subr.bf16.mxu0 0
    %280 = vmatpush1.bf16.msra.mxu0 0
    %281 = vmatprep.subr.bf16.mxu0 0
    %282 = vmatpush1.bf16.msra.mxu0 0
    %283 = vmatprep.mubr.bf16.mxu0 0
    %284 = vmatmul.mubr.bf16.gmra.mrb[0].mxu0 %v249
    %v285 = vpop.f32.mrb[0].mxu0
    %v286 = vadd.f32 0.0, %v285
    %v287 = vpop.f32.mrb[0].mxu0
    %v288 = vpop.f32.mrb[0].mxu0
    %v289 = vpop.f32.mrb[0].mxu0
    %290 = vdwg.mxu0
    %292 = vrot.lane.b32.xlu0 %v286, 2
    %v293 = vpop.permute.xlu0 %292
    %v295 = vsel %vm134, 0.0, %v293
    %v296 = vadd.f32 %v245, %v295
    %s297 = scalar_lea.vmem %s3, 8
    %v298 = vld [vmem:[%s297] sm:$0xf]
    %v300 = vsel %vm192, %v298, 0
    %302 = vmatprep.subr.bf16.mxu0 0
    %303 = vmatpush1.bf16.msra.mxu0 %v198
    %304 = vmatprep.subr.bf16.mxu0 0
    %305 = vmatpush1.bf16.msra.mxu0 0
    %306 = vmatprep.subr.bf16.mxu0 0
    %307 = vmatpush1.bf16.msra.mxu0 0
    %308 = vmatprep.subr.bf16.mxu0 0
    %309 = vmatpush1.bf16.msra.mxu0 0
    %310 = vmatprep.subr.bf16.mxu0 0
    %311 = vmatpush1.bf16.msra.mxu0 0
    %312 = vmatprep.subr.bf16.mxu0 0
    %313 = vmatpush1.bf16.msra.mxu0 0
    %314 = vmatprep.subr.bf16.mxu0 0
    %315 = vmatpush1.bf16.msra.mxu0 0
    %316 = vmatprep.subr.bf16.mxu0 0
    %317 = vmatpush1.bf16.msra.mxu0 0
    %318 = vmatprep.subr.bf16.mxu0 0
    %319 = vmatpush1.bf16.msra.mxu0 0
    %320 = vmatprep.subr.bf16.mxu0 0
    %321 = vmatpush1.bf16.msra.mxu0 0
    %322 = vmatprep.subr.bf16.mxu0 0
    %323 = vmatpush1.bf16.msra.mxu0 0
    %324 = vmatprep.subr.bf16.mxu0 0
    %325 = vmatpush1.bf16.msra.mxu0 0
    %326 = vmatprep.subr.bf16.mxu0 0
    %327 = vmatpush1.bf16.msra.mxu0 0
    %328 = vmatprep.subr.bf16.mxu0 0
    %329 = vmatpush1.bf16.msra.mxu0 0
    %330 = vmatprep.subr.bf16.mxu0 0
    %331 = vmatpush1.bf16.msra.mxu0 0
    %332 = vmatprep.subr.bf16.mxu0 0
    %333 = vmatpush1.bf16.msra.mxu0 0
    %334 = vmatprep.mubr.bf16.mxu0 0
    %335 = vmatmul.mubr.bf16.gmra.mrb[0].mxu0 %v300
    %v336 = vpop.f32.mrb[0].mxu0
    %v337 = vadd.f32 0.0, %v336
    %v338 = vpop.f32.mrb[0].mxu0
    %v339 = vpop.f32.mrb[0].mxu0
    %v340 = vpop.f32.mrb[0].mxu0
    %341 = vdwg.mxu0
    %343 = vrot.lane.b32.xlu0 %v337, 4
    %v344 = vpop.permute.xlu0 %343
    %v346 = vsel %vm31, 0.0, %v344
    %v347 = vadd.f32 %v296, %v346
    %v348 = vmax.f32 %v347, 0.0
    %v349 = vld [vmem:[%s5] sm:$0xf]
    %v350 = vld [vmem:[%s6] sm:$0xff]
    %352 = vset.pattern.permute.xlu0 0
    %353 = vperm.xlu0 %352, %v350
    %v354 = vpop.permute.xlu0 %353
    %v357 = vsel %vm31, %v349, 0
    %359 = vmatprep.subr.bf16.mxu0 0
    %360 = vmatpush1.bf16.msra.mxu0 %v37
    %361 = vmatprep.subr.bf16.mxu0 0
    %362 = vmatpush1.bf16.msra.mxu0 0
    %363 = vmatprep.subr.bf16.mxu0 0
    %364 = vmatpush1.bf16.msra.mxu0 0
    %365 = vmatprep.subr.bf16.mxu0 0
    %366 = vmatpush1.bf16.msra.mxu0 0
    %367 = vmatprep.subr.bf16.mxu0 0
    %368 = vmatpush1.bf16.msra.mxu0 0
    %369 = vmatprep.subr.bf16.mxu0 0
    %370 = vmatpush1.bf16.msra.mxu0 0
    %371 = vmatprep.subr.bf16.mxu0 0
    %372 = vmatpush1.bf16.msra.mxu0 0
    %373 = vmatprep.subr.bf16.mxu0 0
    %374 = vmatpush1.bf16.msra.mxu0 0
    %375 = vmatprep.subr.bf16.mxu0 0
    %376 = vmatpush1.bf16.msra.mxu0 0
    %377 = vmatprep.subr.bf16.mxu0 0
    %378 = vmatpush1.bf16.msra.mxu0 0
    %379 = vmatprep.subr.bf16.mxu0 0
    %380 = vmatpush1.bf16.msra.mxu0 0
    %381 = vmatprep.subr.bf16.mxu0 0
    %382 = vmatpush1.bf16.msra.mxu0 0
    %383 = vmatprep.subr.bf16.mxu0 0
    %384 = vmatpush1.bf16.msra.mxu0 0
    %385 = vmatprep.subr.bf16.mxu0 0
    %386 = vmatpush1.bf16.msra.mxu0 0
    %387 = vmatprep.subr.bf16.mxu0 0
    %388 = vmatpush1.bf16.msra.mxu0 0
    %389 = vmatprep.subr.bf16.mxu0 0
    %390 = vmatpush1.bf16.msra.mxu0 0
    %391 = vmatprep.mubr.bf16.mxu0 0
    %392 = vmatmul.mubr.bf16.gmra.mrb[0].mxu0 %v357
    %v393 = vpop.f32.mrb[0].mxu0
    %v394 = vadd.f32 %v354, %v393
    %v395 = vpop.f32.mrb[0].mxu0
    %v396 = vpop.f32.mrb[0].mxu0
    %v397 = vpop.f32.mrb[0].mxu0
    %398 = vdwg.mxu0
    %v399 = vadd.f32 %v348, %v394
    %v400 = vmax.f32 %v399, 0.0
    %vm401 = vcmask 130048
    %402 = vst.msk [vmem:[#allocation2] sm:$0xff] %vm401, %v400
    %s403 = scalar_lea.vmem %s0, 2
    %v404 = vld [vmem:[%s403] sm:$0x3]
    %v405 = vld [vmem:[%s2] sm:$0xff]
    %v406 = vld [vmem:[%s1] sm:$0xf]
    %v408 = vsel %vm31, %v406, 0
    %v411 = vsel %vm35, %v404, 0
    %413 = vmatprep.subr.bf16.mxu0 0
    %414 = vmatpush1.bf16.msra.mxu0 %v411
    %415 = vmatprep.subr.bf16.mxu0 0
    %416 = vmatpush1.bf16.msra.mxu0 0
    %417 = vmatprep.subr.bf16.mxu0 0
    %418 = vmatpush1.bf16.msra.mxu0 0
    %419 = vmatprep.subr.bf16.mxu0 0
    %420 = vmatpush1.bf16.msra.mxu0 0
    %421 = vmatprep.subr.bf16.mxu0 0
    %422 = vmatpush1.bf16.msra.mxu0 0
    %423 = vmatprep.subr.bf16.mxu0 0
    %424 = vmatpush1.bf16.msra.mxu0 0
    %425 = vmatprep.subr.bf16.mxu0 0
    %426 = vmatpush1.bf16.msra.mxu0 0
    %427 = vmatprep.subr.bf16.mxu0 0
    %428 = vmatpush1.bf16.msra.mxu0 0
    %429 = vmatprep.subr.bf16.mxu0 0
    %430 = vmatpush1.bf16.msra.mxu0 0
    %431 = vmatprep.subr.bf16.mxu0 0
    %432 = vmatpush1.bf16.msra.mxu0 0
    %433 = vmatprep.subr.bf16.mxu0 0
    %434 = vmatpush1.bf16.msra.mxu0 0
    %435 = vmatprep.subr.bf16.mxu0 0
    %436 = vmatpush1.bf16.msra.mxu0 0
    %437 = vmatprep.subr.bf16.mxu0 0
    %438 = vmatpush1.bf16.msra.mxu0 0
    %439 = vmatprep.subr.bf16.mxu0 0
    %440 = vmatpush1.bf16.msra.mxu0 0
    %441 = vmatprep.subr.bf16.mxu0 0
    %442 = vmatpush1.bf16.msra.mxu0 0
    %443 = vmatprep.subr.bf16.mxu0 0
    %444 = vmatpush1.bf16.msra.mxu0 0
    %445 = vmatprep.mubr.bf16.mxu0 0
    %446 = vmatmul.mubr.bf16.gmra.mrb[0].mxu0 %v408
    %v447 = vpop.f32.mrb[0].mxu0
    %v448 = vadd.f32 0.0, %v447
    %v449 = vpop.f32.mrb[0].mxu0
    %v450 = vpop.f32.mrb[0].mxu0
    %v451 = vpop.f32.mrb[0].mxu0
    %452 = vdwg.mxu0
    %454 = vset.pattern.permute.xlu0 0
    %455 = vperm.xlu0 %454, %v405
    %v456 = vpop.permute.xlu0 %455
    %v458 = vadd.f32 %v456, %v448
    %v459 = vld [vmem:[%s85] sm:$0xf]
    %v461 = vsel %vm31, %v459, 0
    %463 = vmatprep.subr.bf16.mxu0 0
    %464 = vmatpush1.bf16.msra.mxu0 %v411
    %465 = vmatprep.subr.bf16.mxu0 0
    %466 = vmatpush1.bf16.msra.mxu0 0
    %467 = vmatprep.subr.bf16.mxu0 0
    %468 = vmatpush1.bf16.msra.mxu0 0
    %469 = vmatprep.subr.bf16.mxu0 0
    %470 = vmatpush1.bf16.msra.mxu0 0
    %471 = vmatprep.subr.bf16.mxu0 0
    %472 = vmatpush1.bf16.msra.mxu0 0
    %473 = vmatprep.subr.bf16.mxu0 0
    %474 = vmatpush1.bf16.msra.mxu0 0
    %475 = vmatprep.subr.bf16.mxu0 0
    %476 = vmatpush1.bf16.msra.mxu0 0
    %477 = vmatprep.subr.bf16.mxu0 0
    %478 = vmatpush1.bf16.msra.mxu0 0
    %479 = vmatprep.subr.bf16.mxu0 0
    %480 = vmatpush1.bf16.msra.mxu0 0
    %481 = vmatprep.subr.bf16.mxu0 0
    %482 = vmatpush1.bf16.msra.mxu0 0
    %483 = vmatprep.subr.bf16.mxu0 0
    %484 = vmatpush1.bf16.msra.mxu0 0
    %485 = vmatprep.subr.bf16.mxu0 0
    %486 = vmatpush1.bf16.msra.mxu0 0
    %487 = vmatprep.subr.bf16.mxu0 0
    %488 = vmatpush1.bf16.msra.mxu0 0
    %489 = vmatprep.subr.bf16.mxu0 0
    %490 = vmatpush1.bf16.msra.mxu0 0
    %491 = vmatprep.subr.bf16.mxu0 0
    %492 = vmatpush1.bf16.msra.mxu0 0
    %493 = vmatprep.subr.bf16.mxu0 0
    %494 = vmatpush1.bf16.msra.mxu0 0
    %495 = vmatprep.mubr.bf16.mxu0 0
    %496 = vmatmul.mubr.bf16.gmra.mrb[0].mxu0 %v461
    %v497 = vpop.f32.mrb[0].mxu0
    %v498 = vadd.f32 0.0, %v497
    %v499 = vpop.f32.mrb[0].mxu0
    %v500 = vpop.f32.mrb[0].mxu0
    %v501 = vpop.f32.mrb[0].mxu0
    %502 = vdwg.mxu0
    %504 = vrot.lane.b32.xlu0 %v498, 2
    %v505 = vpop.permute.xlu0 %504
    %v507 = vsel %vm134, 0.0, %v505
    %v508 = vadd.f32 %v458, %v507
    %v509 = vld [vmem:[%s137] sm:$0xf]
    %v511 = vsel %vm31, %v509, 0
    %513 = vmatprep.subr.bf16.mxu0 0
    %514 = vmatpush1.bf16.msra.mxu0 %v411
    %515 = vmatprep.subr.bf16.mxu0 0
    %516 = vmatpush1.bf16.msra.mxu0 0
    %517 = vmatprep.subr.bf16.mxu0 0
    %518 = vmatpush1.bf16.msra.mxu0 0
    %519 = vmatprep.subr.bf16.mxu0 0
    %520 = vmatpush1.bf16.msra.mxu0 0
    %521 = vmatprep.subr.bf16.mxu0 0
    %522 = vmatpush1.bf16.msra.mxu0 0
    %523 = vmatprep.subr.bf16.mxu0 0
    %524 = vmatpush1.bf16.msra.mxu0 0
    %525 = vmatprep.subr.bf16.mxu0 0
    %526 = vmatpush1.bf16.msra.mxu0 0
    %527 = vmatprep.subr.bf16.mxu0 0
    %528 = vmatpush1.bf16.msra.mxu0 0
    %529 = vmatprep.subr.bf16.mxu0 0
    %530 = vmatpush1.bf16.msra.mxu0 0
    %531 = vmatprep.subr.bf16.mxu0 0
    %532 = vmatpush1.bf16.msra.mxu0 0
    %533 = vmatprep.subr.bf16.mxu0 0
    %534 = vmatpush1.bf16.msra.mxu0 0
    %535 = vmatprep.subr.bf16.mxu0 0
    %536 = vmatpush1.bf16.msra.mxu0 0
    %537 = vmatprep.subr.bf16.mxu0 0
    %538 = vmatpush1.bf16.msra.mxu0 0
    %539 = vmatprep.subr.bf16.mxu0 0
    %540 = vmatpush1.bf16.msra.mxu0 0
    %541 = vmatprep.subr.bf16.mxu0 0
    %542 = vmatpush1.bf16.msra.mxu0 0
    %543 = vmatprep.subr.bf16.mxu0 0
    %544 = vmatpush1.bf16.msra.mxu0 0
    %545 = vmatprep.mubr.bf16.mxu0 0
    %546 = vmatmul.mubr.bf16.gmra.mrb[0].mxu0 %v511
    %v547 = vpop.f32.mrb[0].mxu0
    %v548 = vadd.f32 0.0, %v547
    %v549 = vpop.f32.mrb[0].mxu0
    %v550 = vpop.f32.mrb[0].mxu0
    %v551 = vpop.f32.mrb[0].mxu0
    %552 = vdwg.mxu0
    %554 = vrot.lane.b32.xlu0 %v548, 4
    %v555 = vpop.permute.xlu0 %554
    %v557 = vsel %vm31, 0.0, %v555
    %v558 = vadd.f32 %v508, %v557
    %v559 = vmax.f32 %v558, 0.0
    %v560 = vpack.c.bf16 %v559, %v559
    %v561 = vld [vmem:[%s4] sm:$0xff]
    %v562 = vld [vmem:[%s3] sm:$0xf]
    %v564 = vsel %vm192, %v562, 0
    %v567 = vsel %vm196, %v560, 0
    %569 = vmatprep.subr.bf16.mxu0 0
    %570 = vmatpush1.bf16.msra.mxu0 %v567
    %571 = vmatprep.subr.bf16.mxu0 0
    %572 = vmatpush1.bf16.msra.mxu0 0
    %573 = vmatprep.subr.bf16.mxu0 0
    %574 = vmatpush1.bf16.msra.mxu0 0
    %575 = vmatprep.subr.bf16.mxu0 0
    %576 = vmatpush1.bf16.msra.mxu0 0
    %577 = vmatprep.subr.bf16.mxu0 0
    %578 = vmatpush1.bf16.msra.mxu0 0
    %579 = vmatprep.subr.bf16.mxu0 0
    %580 = vmatpush1.bf16.msra.mxu0 0
    %581 = vmatprep.subr.bf16.mxu0 0
    %582 = vmatpush1.bf16.msra.mxu0 0
    %583 = vmatprep.subr.bf16.mxu0 0
    %584 = vmatpush1.bf16.msra.mxu0 0
    %585 = vmatprep.subr.bf16.mxu0 0
    %586 = vmatpush1.bf16.msra.mxu0 0
    %587 = vmatprep.subr.bf16.mxu0 0
    %588 = vmatpush1.bf16.msra.mxu0 0
    %589 = vmatprep.subr.bf16.mxu0 0
    %590 = vmatpush1.bf16.msra.mxu0 0
    %591 = vmatprep.subr.bf16.mxu0 0
    %592 = vmatpush1.bf16.msra.mxu0 0
    %593 = vmatprep.subr.bf16.mxu0 0
    %594 = vmatpush1.bf16.msra.mxu0 0
    %595 = vmatprep.subr.bf16.mxu0 0
    %596 = vmatpush1.bf16.msra.mxu0 0
    %597 = vmatprep.subr.bf16.mxu0 0
    %598 = vmatpush1.bf16.msra.mxu0 0
    %599 = vmatprep.subr.bf16.mxu0 0
    %600 = vmatpush1.bf16.msra.mxu0 0
    %601 = vmatprep.mubr.bf16.mxu0 0
    %602 = vmatmul.mubr.bf16.gmra.mrb[0].mxu0 %v564
    %v603 = vpop.f32.mrb[0].mxu0
    %v604 = vadd.f32 0.0, %v603
    %v605 = vpop.f32.mrb[0].mxu0
    %v606 = vpop.f32.mrb[0].mxu0
    %v607 = vpop.f32.mrb[0].mxu0
    %608 = vdwg.mxu0
    %610 = vset.pattern.permute.xlu0 0
    %611 = vperm.xlu0 %610, %v561
    %v612 = vpop.permute.xlu0 %611
    %v614 = vadd.f32 %v612, %v604
    %v615 = vld [vmem:[%s246] sm:$0xf]
    %v617 = vsel %vm192, %v615, 0
    %619 = vmatprep.subr.bf16.mxu0 0
    %620 = vmatpush1.bf16.msra.mxu0 %v567
    %621 = vmatprep.subr.bf16.mxu0 0
    %622 = vmatpush1.bf16.msra.mxu0 0
    %623 = vmatprep.subr.bf16.mxu0 0
    %624 = vmatpush1.bf16.msra.mxu0 0
    %625 = vmatprep.subr.bf16.mxu0 0
    %626 = vmatpush1.bf16.msra.mxu0 0
    %627 = vmatprep.subr.bf16.mxu0 0
    %628 = vmatpush1.bf16.msra.mxu0 0
    %629 = vmatprep.subr.bf16.mxu0 0
    %630 = vmatpush1.bf16.msra.mxu0 0
    %631 = vmatprep.subr.bf16.mxu0 0
    %632 = vmatpush1.bf16.msra.mxu0 0
    %633 = vmatprep.subr.bf16.mxu0 0
    %634 = vmatpush1.bf16.msra.mxu0 0
    %635 = vmatprep.subr.bf16.mxu0 0
    %636 = vmatpush1.bf16.msra.mxu0 0
    %637 = vmatprep.subr.bf16.mxu0 0
    %638 = vmatpush1.bf16.msra.mxu0 0
    %639 = vmatprep.subr.bf16.mxu0 0
    %640 = vmatpush1.bf16.msra.mxu0 0
    %641 = vmatprep.subr.bf16.mxu0 0
    %642 = vmatpush1.bf16.msra.mxu0 0
    %643 = vmatprep.subr.bf16.mxu0 0
    %644 = vmatpush1.bf16.msra.mxu0 0
    %645 = vmatprep.subr.bf16.mxu0 0
    %646 = vmatpush1.bf16.msra.mxu0 0
    %647 = vmatprep.subr.bf16.mxu0 0
    %648 = vmatpush1.bf16.msra.mxu0 0
    %649 = vmatprep.subr.bf16.mxu0 0
    %650 = vmatpush1.bf16.msra.mxu0 0
    %651 = vmatprep.mubr.bf16.mxu0 0
    %652 = vmatmul.mubr.bf16.gmra.mrb[0].mxu0 %v617
    %v653 = vpop.f32.mrb[0].mxu0
    %v654 = vadd.f32 0.0, %v653
    %v655 = vpop.f32.mrb[0].mxu0
    %v656 = vpop.f32.mrb[0].mxu0
    %v657 = vpop.f32.mrb[0].mxu0
    %658 = vdwg.mxu0
    %660 = vrot.lane.b32.xlu0 %v654, 2
    %v661 = vpop.permute.xlu0 %660
    %v663 = vsel %vm134, 0.0, %v661
    %v664 = vadd.f32 %v614, %v663
    %v665 = vld [vmem:[%s297] sm:$0xf]
    %v667 = vsel %vm192, %v665, 0
    %669 = vmatprep.subr.bf16.mxu0 0
    %670 = vmatpush1.bf16.msra.mxu0 %v567
    %671 = vmatprep.subr.bf16.mxu0 0
    %672 = vmatpush1.bf16.msra.mxu0 0
    %673 = vmatprep.subr.bf16.mxu0 0
    %674 = vmatpush1.bf16.msra.mxu0 0
    %675 = vmatprep.subr.bf16.mxu0 0
    %676 = vmatpush1.bf16.msra.mxu0 0
    %677 = vmatprep.subr.bf16.mxu0 0
    %678 = vmatpush1.bf16.msra.mxu0 0
    %679 = vmatprep.subr.bf16.mxu0 0
    %680 = vmatpush1.bf16.msra.mxu0 0
    %681 = vmatprep.subr.bf16.mxu0 0
    %682 = vmatpush1.bf16.msra.mxu0 0
    %683 = vmatprep.subr.bf16.mxu0 0
    %684 = vmatpush1.bf16.msra.mxu0 0
    %685 = vmatprep.subr.bf16.mxu0 0
    %686 = vmatpush1.bf16.msra.mxu0 0
    %687 = vmatprep.subr.bf16.mxu0 0
    %688 = vmatpush1.bf16.msra.mxu0 0
    %689 = vmatprep.subr.bf16.mxu0 0
    %690 = vmatpush1.bf16.msra.mxu0 0
    %691 = vmatprep.subr.bf16.mxu0 0
    %692 = vmatpush1.bf16.msra.mxu0 0
    %693 = vmatprep.subr.bf16.mxu0 0
    %694 = vmatpush1.bf16.msra.mxu0 0
    %695 = vmatprep.subr.bf16.mxu0 0
    %696 = vmatpush1.bf16.msra.mxu0 0
    %697 = vmatprep.subr.bf16.mxu0 0
    %698 = vmatpush1.bf16.msra.mxu0 0
    %699 = vmatprep.subr.bf16.mxu0 0
    %700 = vmatpush1.bf16.msra.mxu0 0
    %701 = vmatprep.mubr.bf16.mxu0 0
    %702 = vmatmul.mubr.bf16.gmra.mrb[0].mxu0 %v667
    %v703 = vpop.f32.mrb[0].mxu0
    %v704 = vadd.f32 0.0, %v703
    %v705 = vpop.f32.mrb[0].mxu0
    %v706 = vpop.f32.mrb[0].mxu0
    %v707 = vpop.f32.mrb[0].mxu0
    %708 = vdwg.mxu0
    %710 = vrot.lane.b32.xlu0 %v704, 4
    %v711 = vpop.permute.xlu0 %710
    %v713 = vsel %vm31, 0.0, %v711
    %v714 = vadd.f32 %v664, %v713
    %v715 = vmax.f32 %v714, 0.0
    %v716 = vld [vmem:[%s5] sm:$0xf]
    %v717 = vld [vmem:[%s6] sm:$0xff]
    %719 = vset.pattern.permute.xlu0 0
    %720 = vperm.xlu0 %719, %v717
    %v721 = vpop.permute.xlu0 %720
    %v724 = vsel %vm31, %v716, 0
    %726 = vmatprep.subr.bf16.mxu0 0
    %727 = vmatpush1.bf16.msra.mxu0 %v411
    %728 = vmatprep.subr.bf16.mxu0 0
    %729 = vmatpush1.bf16.msra.mxu0 0
    %730 = vmatprep.subr.bf16.mxu0 0
    %731 = vmatpush1.bf16.msra.mxu0 0
    %732 = vmatprep.subr.bf16.mxu0 0
    %733 = vmatpush1.bf16.msra.mxu0 0
    %734 = vmatprep.subr.bf16.mxu0 0
    %735 = vmatpush1.bf16.msra.mxu0 0
    %736 = vmatprep.subr.bf16.mxu0 0
    %737 = vmatpush1.bf16.msra.mxu0 0
    %738 = vmatprep.subr.bf16.mxu0 0
    %739 = vmatpush1.bf16.msra.mxu0 0
    %740 = vmatprep.subr.bf16.mxu0 0
    %741 = vmatpush1.bf16.msra.mxu0 0
    %742 = vmatprep.subr.bf16.mxu0 0
    %743 = vmatpush1.bf16.msra.mxu0 0
    %744 = vmatprep.subr.bf16.mxu0 0
    %745 = vmatpush1.bf16.msra.mxu0 0
    %746 = vmatprep.subr.bf16.mxu0 0
    %747 = vmatpush1.bf16.msra.mxu0 0
    %748 = vmatprep.subr.bf16.mxu0 0
    %749 = vmatpush1.bf16.msra.mxu0 0
    %750 = vmatprep.subr.bf16.mxu0 0
    %751 = vmatpush1.bf16.msra.mxu0 0
    %752 = vmatprep.subr.bf16.mxu0 0
    %753 = vmatpush1.bf16.msra.mxu0 0
    %754 = vmatprep.subr.bf16.mxu0 0
    %755 = vmatpush1.bf16.msra.mxu0 0
    %756 = vmatprep.subr.bf16.mxu0 0
    %757 = vmatpush1.bf16.msra.mxu0 0
    %758 = vmatprep.mubr.bf16.mxu0 0
    %759 = vmatmul.mubr.bf16.gmra.mrb[0].mxu0 %v724
    %v760 = vpop.f32.mrb[0].mxu0
    %v761 = vadd.f32 %v721, %v760
    %v762 = vpop.f32.mrb[0].mxu0
    %v763 = vpop.f32.mrb[0].mxu0
    %v764 = vpop.f32.mrb[0].mxu0
    %765 = vdwg.mxu0
    %v766 = vadd.f32 %v715, %v761
    %v767 = vmax.f32 %v766, 0.0
    %s768 = scalar_lea.vmem [#allocation2], 8
    %769 = vst.msk [vmem:[%s768] sm:$0xff] %vm401, %v767
    // Predicated region
    $region30: #{tpu_custom_call.1} parent=1 // pred_check
      _
    $region31: #{tpu_custom_call.1} parent=1 // pred_check_branch
      %771 = sbr.rel (0) target = $region33
    $region32: #{tpu_custom_call.1} parent=1 // pred_region
      %s773 = ssub.s32 256, 256
      %774 = vsyncadd [#allocation3], %s773
      %s775 = sshll.u32 [#allocation2], 4
      %s776 = int_to_ptr.vmem [resolvable:$true] %s775
      %781 = dma.vmem_to_hbm [thread:$0]  %s776, 256, %s7, [#allocation3], 128, 128, 8
    $region33: #{tpu_custom_call.1} parent=1 // pred_fallthru
      _
    // Predicated region
    $region34: #{tpu_custom_call.1} parent=1 // pred_check
      _
    $region35: #{tpu_custom_call.1} parent=1 // pred_check_branch
      %783 = sbr.rel (0) target = $region37
    $region36: #{tpu_custom_call.1} parent=1 // pred_region
      %784 = dma.done [#allocation3], 256
    $region37: #{tpu_custom_call.1} parent=1 // pred_fallthru
      _
    %785 = vsyncpa [#allocation3], 1

</llo_original>
